<compile_context>
chip_gen: v6e
topology: v6e:2x2x1
jax: 0.10.0
libtpu: 0.0.40
codegen_flags: <defaults>
</compile_context>

<pallas_src>
import numpy as np
import jax
import jax.numpy as jnp
from jax.experimental import pallas as pl
from jax.experimental.pallas import tpu as pltpu


_PAD_SENTINEL = 2 ** 30  # never matches any table column index


def _round_up(x, m):
    return ((x + m - 1) // m) * m


# ----------------------------- kernels --------------------------------------
def _embed_kernel_rows(keys_ref, table_ref, out_ref):
    # keys_ref:  (TM, 2)    int32  -- col 0: token id, col 1: V + position
    # table_ref: (Vcat, H)  f32    -- [tok_table; pe_table; zero pad]
    # out_ref:   (TM, H)    f32    -- natural layout, lane-dense (H >= 128)
    tm = out_ref.shape[0]
    vcat = table_ref.shape[0]
    keys = keys_ref[...]
    col = jax.lax.broadcasted_iota(jnp.int32, (tm, vcat), 1)
    # Token and position indices live in disjoint ranges -> OR is exact;
    # single cast to the matmul operand dtype.
    onehot = ((col == keys[:, 0:1]) | (col == keys[:, 1:2])).astype(jnp.float32)
    out_ref[...] = jnp.dot(onehot, table_ref[...],
                           preferred_element_type=jnp.float32)


def _embed_kernel_lanes(keys_ref, table_t_ref, out_ref):
    # keys_ref:    (2, TM)   int32  -- row 0: token id, row 1: V + position
    # table_t_ref: (H, Vcat) f32
    # out_ref:     (H, TM)   f32    -- lane-dense output for H < 128
    vcat = table_t_ref.shape[1]
    tm = out_ref.shape[1]
    keys = keys_ref[...]
    col = jax.lax.broadcasted_iota(jnp.int32, (vcat, tm), 0)
    onehot = ((col == keys[0:1, :]) | (col == keys[1:2, :])).astype(jnp.float32)
    out_ref[...] = jnp.dot(table_t_ref[...], onehot,
                           preferred_element_type=jnp.float32)


# ----------------------------- host helpers ---------------------------------
def make_pe_table(num_positions, hidden, lambda_max=10000.0, lambda_min=1e-05):
    """Sinusoidal position table, computed exactly like the torch module
    (float64 div_term buffer, sin/cos in f64, then cast to float32)."""
    base = lambda_max / (2.0 * np.pi)
    scale = lambda_min / lambda_max
    div_term = base * scale ** (np.arange(0, hidden, 2, dtype=np.float64)
                                / hidden)                        # (H/2,)
    pos = np.arange(num_positions, dtype=np.float64)[:, None]    # (P, 1)
    pe = np.concatenate([np.sin(pos / div_term),
                         np.cos(pos / div_term)], axis=-1)       # (P, H)
    return jnp.asarray(pe.astype(np.float32))


def _derive_row_tile(n_rows, per_row_bytes, resident_bytes,
                     budget_bytes=12 * 1024 * 1024):
    """Row tile sized from a VMEM budget (fits v5e's 16 MiB scoped default,
    v6e/v7x 32 MiB, with slack), instead of a hard cap."""
    avail = max(budget_bytes - resident_bytes, 2 * 1024 * 1024)
    tm = int(avail // per_row_bytes)
    tm = max(128, min(tm, 8192))
    tm = (tm // 256) * 256 if tm >= 256 else 128   # MXU-aligned streamed M
    tm = min(tm, _round_up(n_rows, 128))
    return max(128, (tm // 128) * 128)


def glycan_seq_embedding(tgt, pos_index, tok_table, pe_table):
    """out[b, l] = tok_table[tgt[b, l]] + pe_table[pos_index[b, l]]

    Note: out-of-range tgt / pos_index entries contribute zero (no one-hot
    hit) instead of raising like torch's gather would."""
    B, L = tgt.shape
    V, H = tok_table.shape
    P = pe_table.shape[0]
    n = B * L

    # Fused lookup table, padded ONCE on the host to a Vcat multiple of 128.
    vcat = V + P
    vcat_pad = _round_up(vcat, 128)
    table = jnp.concatenate(
        [tok_table.astype(jnp.float32),
         pe_table.astype(jnp.float32),
         jnp.zeros((vcat_pad - vcat, H), jnp.float32)], axis=0)   # (Vcat_pad, H)

    ids = tgt.reshape(n).astype(jnp.int32)
    posk = pos_index.reshape(n).astype(jnp.int32) + V

    use_lane_layout = H < 128   # transposed (H, TM) path only when H < 128

    # Per-row VMEM bytes: one-hot + iota intermediates (3x f32 of width Vcat),
    # double-buffered output tile, double-buffered (padded) key tile.
    keys_row_bytes = (2 * 8 * 4) if use_lane_layout else (2 * 128 * 4)
    per_row = 4 * 3 * vcat_pad + 2 * 4 * max(H, 8) + keys_row_bytes
    table_bytes = int(table.size) * 4
    tm = _derive_row_tile(n, per_row, 2 * table_bytes)
    n_pad = _round_up(n, tm)
    grid = (n_pad // tm,)

    vmem_est = 2 * table_bytes + tm * per_row
    vmem_limit = int(min(64 * 1024 * 1024,
                         max(24 * 1024 * 1024, 2 * vmem_est)))

    cost = pl.CostEstimate(
        flops=2 * n_pad * vcat_pad * H,
        transcendentals=0,
        bytes_accessed=table_bytes + n_pad * H * 4 + 2 * n_pad * 4)

    # Single-buffer the constant-index full table once it is big enough to
    # matter for VMEM (v7x has only 64 MiB physical / 32 MiB scoped default);
    # tiny tables keep the default spec.
    if table_bytes >= (1 << 20):
        table_spec_kw = dict(pipeline_mode=pl.Buffered(1))
    else:
        table_spec_kw = {}

    compiler_params = pltpu.CompilerParams(
        dimension_semantics=("parallel",),
        vmem_limit_bytes=vmem_limit)

    if use_lane_layout:
        # Lane-dense (H, TM) output: avoids masked sub-128-lane stores.
        keys = jnp.stack([ids, posk], axis=0)                     # (2, n)
        keys = jnp.pad(keys, ((0, 0), (0, n_pad - n)),
                       constant_values=_PAD_SENTINEL)
        out = pl.pallas_call(
            _embed_kernel_lanes,
            out_shape=jax.ShapeDtypeStruct((H, n_pad), jnp.float32),
            grid=grid,
            in_specs=[
                pl.BlockSpec((2, tm), lambda r: (0, r)),
                pl.BlockSpec((H, vcat_pad), lambda r: (0, 0), **table_spec_kw),
            ],
            out_specs=pl.BlockSpec((H, tm), lambda r: (0, r)),
            compiler_params=compiler_params,
            cost_estimate=cost,
        )(keys, table.T)
        # Wrapper-side layout plumbing (only needed for the H < 128 path).
        return out[:, :n].T.reshape(B, L, H)

    # Natural (rows, H) fast path: output already lane-dense, no transpose.
    keys = jnp.stack([ids, posk], axis=1)                         # (n, 2)
    keys = jnp.pad(keys, ((0, n_pad - n), (0, 0)),
                   constant_values=_PAD_SENTINEL)
    out = pl.pallas_call(
        _embed_kernel_rows,
        out_shape=jax.ShapeDtypeStruct((n_pad, H), jnp.float32),
        grid=grid,
        in_specs=[
            pl.BlockSpec((tm, 2), lambda r: (r, 0)),
            pl.BlockSpec((vcat_pad, H), lambda r: (0, 0), **table_spec_kw),
        ],
        out_specs=pl.BlockSpec((tm, H), lambda r: (r, 0)),
        compiler_params=compiler_params,
        cost_estimate=cost,
    )(keys, table)
    return out[:n].reshape(B, L, H)


# ---- pure-numpy reference mirroring the PyTorch forward (verification) ------
def ref_forward(tgt_np, pos_np, tok_table_np, hidden,
                lambda_max=10000.0, lambda_min=1e-05):
    base = lambda_max / (2.0 * np.pi)
    scale = lambda_min / lambda_max
    div_term = base * scale ** (np.arange(0, hidden, 2, dtype=np.float64)
                                / hidden)
    p = pos_np.astype(np.float64)[..., None]
    pe = np.concatenate([np.sin(p / div_term),
                         np.cos(p / div_term)], axis=-1).astype(np.float32)
    return tok_table_np[tgt_np] + pe


if __name__ == "__main__":
    def _check(hidden_size, max_len, aa_dict_size, B, L):
        key = jax.random.PRNGKey(0)
        k_tok, k_tgt = jax.random.split(key, 2)
        tok_table = jax.random.normal(k_tok, (aa_dict_size, hidden_size),
                                      dtype=jnp.float32)
        pe_table = make_pe_table(max_len, hidden_size)
        tgt = jax.random.randint(k_tgt, (B, L), 0, aa_dict_size,
                                 dtype=jnp.int32)
        pos_index = jnp.broadcast_to(jnp.arange(L, dtype=jnp.int32), (B, L))

        out = glycan_seq_embedding(tgt, pos_index, tok_table, pe_table)
        out = jax.block_until_ready(out)

        ref = ref_forward(np.asarray(tgt), np.asarray(pos_index),
                          np.asarray(tok_table), hidden_size)
        np.testing.assert_allclose(np.asarray(out), ref, rtol=1e-6, atol=1e-6)

    # H < 128 -> lane-dense transposed path (module's small config).
    _check(hidden_size=32, max_len=32, aa_dict_size=16, B=2, L=8)
    # H multiple of 128 -> natural (rows, H) fast path (no wrapper transpose).
    _check(hidden_size=128, max_len=40, aa_dict_size=21, B=2, L=8)

    print("KERNEL_OK")
</pallas_src>

<mosaic_0001>
module attributes {stable_mosaic.version = 11 : i64} {
  func.func @_embed_kernel_lanes(%arg0: i32, %arg1: memref<2x128xi32, #tpu.memory_space<vmem>>, %arg2: memref<32x128xf32, #tpu.memory_space<vmem>>, %arg3: memref<32x128xf32, #tpu.memory_space<vmem>>) attributes {dimension_semantics = [#tpu.dimension_semantics<parallel>], iteration_bounds = array<i64: 1>, scalar_prefetch = 0 : i64, scratch_operands = 0 : i64, tpu.core_type = #tpu.core_type<tc>, window_params = [{transform_indices = @transform_0, window_bounds = array<i64: 2, 128>}, {pipeline_mode = #tpu.pipeline_mode<synchronous>, transform_indices = @transform_1, window_bounds = array<i64: 32, 128>}, {transform_indices = @transform_2, window_bounds = array<i64: 32, 128>}]} {
    %c0 = arith.constant 0 : index
    %c0_0 = arith.constant 0 : index
    %0 = vector.load %arg1[%c0, %c0_0] : memref<2x128xi32, #tpu.memory_space<vmem>>, vector<2x128xi32>
    %1 = tpu.iota {dimensions = array<i32: 0>} : vector<128x128xi32>
    %2 = vector.extract_strided_slice %0 {offsets = [0, 0], sizes = [1, 128], strides = [1, 1]} : vector<2x128xi32> to vector<1x128xi32>
    %3 = vector.broadcast %2 : vector<1x128xi32> to vector<128x128xi32>
    %4 = arith.cmpi eq, %1, %3 : vector<128x128xi32>
    %5 = vector.extract_strided_slice %0 {offsets = [1, 0], sizes = [1, 128], strides = [1, 1]} : vector<2x128xi32> to vector<1x128xi32>
    %6 = vector.broadcast %5 : vector<1x128xi32> to vector<128x128xi32>
    %7 = arith.cmpi eq, %1, %6 : vector<128x128xi32>
    %8 = arith.ori %4, %7 : vector<128x128xi1>
    %9 = arith.extui %8 : vector<128x128xi1> to vector<128x128xi32>
    %10 = arith.sitofp %9 : vector<128x128xi32> to vector<128x128xf32>
    %c0_1 = arith.constant 0 : index
    %c0_2 = arith.constant 0 : index
    %11 = vector.load %arg2[%c0_1, %c0_2] : memref<32x128xf32, #tpu.memory_space<vmem>>, vector<32x128xf32>
    %cst = arith.constant dense<0.000000e+00> : vector<32x128xf32>
    %12 = tpu.matmul %11, %10, %cst {dimension_numbers = #tpu.dot_dimension_numbers<[1], [0], [0], [1], [0, 0, 1, 1], [], []>} : vector<32x128xf32>, vector<128x128xf32>, vector<32x128xf32> -> vector<32x128xf32>
    %c0_3 = arith.constant 0 : index
    %c0_4 = arith.constant 0 : index
    %13 = vector.load %arg3[%c0_3, %c0_4] : memref<32x128xf32, #tpu.memory_space<vmem>>, vector<32x128xf32>
    tpu.vector_store %arg3[%c0_3, %c0_4], %12 {strides = array<i32>} : memref<32x128xf32, #tpu.memory_space<vmem>>, vector<32x128xf32>,
    return
  }
  func.func @transform_0(%arg0: i32) -> (i32, i32) {
    %c0_i32 = arith.constant 0 : i32
    %c0_i32_0 = arith.constant 0 : i32
    return %c0_i32, %arg0 : i32, i32
  }
  func.func @transform_1(%arg0: i32) -> (i32, i32) {
    %c0_i32 = arith.constant 0 : i32
    %c0_i32_0 = arith.constant 0 : i32
    %c0_i32_1 = arith.constant 0 : i32
    return %c0_i32, %c0_i32_0 : i32, i32
  }
  func.func @transform_2(%arg0: i32) -> (i32, i32) {
    %c0_i32 = arith.constant 0 : i32
    %c0_i32_0 = arith.constant 0 : i32
    return %c0_i32, %arg0 : i32, i32
  }
}

</mosaic_0001>

<llo_original>
// kernel: tpu_custom_call.1
$region0: #{tpu_custom_call.1}
  #allocation0 [shape = 'u32[]', space=smem, size = 0x4, offset = 0x4, fixed_abs, tag = 'smem constant byte address 0x4 - core index']
  #allocation1 [shape = 'u32[144,128]{1,0:T(1,128)}', space=vmem, size = 0x12000, scoped, tag = 'internal scratch']
  %s0 = inlined_call_operand.hbm [shape: s32[2,128], index: 0, kind: input, shape index: {}]
  %s1 = inlined_call_operand.hbm [shape: f32[32,128], index: 1, kind: input, shape index: {}]
  %s2 = inlined_call_operand.hbm [shape: f32[32,128], index: 2, kind: output, shape index: {}]
  %s3 = sld [smem:[#allocation0]]
  $region26: #{tpu_custom_call.1} parent=0
    _
  %s5 = ssub.s32 1, %s3
  %s6 = scalar_select 0, %s5, %s3
  $region1: #{tpu_custom_call.1} parent=0
    #allocation2 [shape = 'u8[1024]{0}', space=vmem, size = 0x400, scoped, tag = 'input window, operand 0, single buffered']
    #allocation3 [shape = 's32[1]{0}', space=sflag, size = 0x4, scoped, tag = 'scoped memory for tpu_custom_call.1']
    #allocation4 [shape = 's32[1]{0}', space=sflag, size = 0x4, scoped, tag = 'scoped memory for tpu_custom_call.1']
    #allocation5 [shape = 'u8[16384]{0}', space=vmem, size = 0x4000, scoped, tag = 'input window, operand 1, single buffered']
    #allocation6 [shape = 's32[1]{0}', space=sflag, size = 0x4, scoped, tag = 'scoped memory for tpu_custom_call.1']
    #allocation7 [shape = 'u8[16384]{0}', space=vmem, size = 0x4000, scoped, tag = 'output window, operand 0, single buffered']
    %7 = vsyncpa [#allocation3], 0
    %8 = vsyncpa [#allocation6], 0
    %9 = vsyncpa [#allocation4], 0
    // Predicated region
    $region2: #{tpu_custom_call.1} parent=1 // pred_check
      _
    $region3: #{tpu_custom_call.1} parent=1 // pred_check_branch
      %11 = sbr.rel (0) target = $region5
    $region4: #{tpu_custom_call.1} parent=1 // pred_region
      %s13 = ssub.s32 32, 32
      %14 = vsyncadd [#allocation3], %s13
      %s16 = sshll.u32 [#allocation2], 4
      %s17 = int_to_ptr.vmem [resolvable:$true] %s16
      %19 = dma.hbm_to_vmem [thread:$0]  %s0, 32, %s17, [#allocation3]
    $region5: #{tpu_custom_call.1} parent=1 // pred_fallthru
      _
    // Predicated region
    $region6: #{tpu_custom_call.1} parent=1 // pred_check
      _
    $region7: #{tpu_custom_call.1} parent=1 // pred_check_branch
      %21 = sbr.rel (0) target = $region9
    $region8: #{tpu_custom_call.1} parent=1 // pred_region
      %s23 = ssub.s32 512, 512
      %24 = vsyncadd [#allocation6], %s23
      %s25 = sshll.u32 [#allocation5], 4
      %s26 = int_to_ptr.vmem [resolvable:$true] %s25
      %31 = dma.hbm_to_vmem [thread:$0]  %s1, 512, %s26, [#allocation6], 128, 128, 8
    $region9: #{tpu_custom_call.1} parent=1 // pred_fallthru
      _
    // Predicated region
    $region10: #{tpu_custom_call.1} parent=1 // pred_check
      _
    $region11: #{tpu_custom_call.1} parent=1 // pred_check_branch
      %33 = sbr.rel (0) target = $region13
    $region12: #{tpu_custom_call.1} parent=1 // pred_region
      %34 = dma.done [#allocation3], 32
    $region13: #{tpu_custom_call.1} parent=1 // pred_fallthru
      _
    // Predicated region
    $region14: #{tpu_custom_call.1} parent=1 // pred_check
      _
    $region15: #{tpu_custom_call.1} parent=1 // pred_check_branch
      %36 = sbr.rel (0) target = $region17
    $region16: #{tpu_custom_call.1} parent=1 // pred_region
      %37 = dma.done [#allocation6], 512
    $region17: #{tpu_custom_call.1} parent=1 // pred_fallthru
      _
    %v38 = vld [vmem:[#allocation2] sm:$0x3]
    %v39 = vlaneseq
    %v40 = vshrl.u32 %v39, 7
    %v41 = vadd.s32 %v40, 8
    %v42 = vadd.s32 %v40, 16
    %v43 = vadd.s32 %v40, 24
    %v44 = vadd.s32 %v40, 32
    %v45 = vadd.s32 %v40, 40
    %v46 = vadd.s32 %v40, 48
    %v47 = vadd.s32 %v40, 56
    %v48 = vadd.s32 %v40, 64
    %v49 = vadd.s32 %v40, 72
    %v50 = vadd.s32 %v40, 80
    %v51 = vadd.s32 %v40, 88
    %v52 = vadd.s32 %v40, 96
    %v53 = vadd.s32 %v40, 104
    %v54 = vadd.s32 %v40, 112
    %v55 = vadd.s32 %v40, 120
    %v56 = vlaneseq
    %v57 = vshrl.u32 %v56, 7
    %v58 = vsub.s32 0, %v57
    %v59 = vrot.slane %v38, %v58
    %vm60 = vcmp.eq.s32.totalorder %v40, %v59
    %vm61 = vcmp.eq.s32.totalorder %v41, %v59
    %vm62 = vcmp.eq.s32.totalorder %v42, %v59
    %vm63 = vcmp.eq.s32.totalorder %v43, %v59
    %vm64 = vcmp.eq.s32.totalorder %v44, %v59
    %vm65 = vcmp.eq.s32.totalorder %v45, %v59
    %vm66 = vcmp.eq.s32.totalorder %v46, %v59
    %vm67 = vcmp.eq.s32.totalorder %v47, %v59
    %vm68 = vcmp.eq.s32.totalorder %v48, %v59
    %vm69 = vcmp.eq.s32.totalorder %v49, %v59
    %vm70 = vcmp.eq.s32.totalorder %v50, %v59
    %vm71 = vcmp.eq.s32.totalorder %v51, %v59
    %vm72 = vcmp.eq.s32.totalorder %v52, %v59
    %vm73 = vcmp.eq.s32.totalorder %v53, %v59
    %vm74 = vcmp.eq.s32.totalorder %v54, %v59
    %vm75 = vcmp.eq.s32.totalorder %v55, %v59
    %v76 = vlaneseq
    %v77 = vshrl.u32 %v76, 7
    %v78 = vsub.s32 1, %v77
    %v79 = vrot.slane %v38, %v78
    %vm80 = vcmp.eq.s32.totalorder %v40, %v79
    %vm81 = vcmp.eq.s32.totalorder %v41, %v79
    %vm82 = vcmp.eq.s32.totalorder %v42, %v79
    %vm83 = vcmp.eq.s32.totalorder %v43, %v79
    %vm84 = vcmp.eq.s32.totalorder %v44, %v79
    %vm85 = vcmp.eq.s32.totalorder %v45, %v79
    %vm86 = vcmp.eq.s32.totalorder %v46, %v79
    %vm87 = vcmp.eq.s32.totalorder %v47, %v79
    %vm88 = vcmp.eq.s32.totalorder %v48, %v79
    %vm89 = vcmp.eq.s32.totalorder %v49, %v79
    %vm90 = vcmp.eq.s32.totalorder %v50, %v79
    %vm91 = vcmp.eq.s32.totalorder %v51, %v79
    %vm92 = vcmp.eq.s32.totalorder %v52, %v79
    %vm93 = vcmp.eq.s32.totalorder %v53, %v79
    %vm94 = vcmp.eq.s32.totalorder %v54, %v79
    %vm95 = vcmp.eq.s32.totalorder %v55, %v79
    %vm96 = vmor %vm60, %vm80
    %vm97 = vmor %vm61, %vm81
    %vm98 = vmor %vm62, %vm82
    %vm99 = vmor %vm63, %vm83
    %vm100 = vmor %vm64, %vm84
    %vm101 = vmor %vm65, %vm85
    %vm102 = vmor %vm66, %vm86
    %vm103 = vmor %vm67, %vm87
    %vm104 = vmor %vm68, %vm88
    %vm105 = vmor %vm69, %vm89
    %vm106 = vmor %vm70, %vm90
    %vm107 = vmor %vm71, %vm91
    %vm108 = vmor %vm72, %vm92
    %vm109 = vmor %vm73, %vm93
    %vm110 = vmor %vm74, %vm94
    %vm111 = vmor %vm75, %vm95
    %v112 = vsel %vm96, 1, 0
    %v113 = vsel %vm97, 1, 0
    %v114 = vsel %vm98, 1, 0
    %v115 = vsel %vm99, 1, 0
    %v116 = vsel %vm100, 1, 0
    %v117 = vsel %vm101, 1, 0
    %v118 = vsel %vm102, 1, 0
    %v119 = vsel %vm103, 1, 0
    %v120 = vsel %vm104, 1, 0
    %v121 = vsel %vm105, 1, 0
    %v122 = vsel %vm106, 1, 0
    %v123 = vsel %vm107, 1, 0
    %v124 = vsel %vm108, 1, 0
    %v125 = vsel %vm109, 1, 0
    %v126 = vsel %vm110, 1, 0
    %v127 = vsel %vm111, 1, 0
    %v128 = vcvt.s32.f32 %v112
    %v129 = vcvt.s32.f32 %v113
    %v130 = vcvt.s32.f32 %v114
    %v131 = vcvt.s32.f32 %v115
    %v132 = vcvt.s32.f32 %v116
    %v133 = vcvt.s32.f32 %v117
    %v134 = vcvt.s32.f32 %v118
    %v135 = vcvt.s32.f32 %v119
    %v136 = vcvt.s32.f32 %v120
    %v137 = vcvt.s32.f32 %v121
    %v138 = vcvt.s32.f32 %v122
    %v139 = vcvt.s32.f32 %v123
    %v140 = vcvt.s32.f32 %v124
    %v141 = vcvt.s32.f32 %v125
    %v142 = vcvt.s32.f32 %v126
    %v143 = vcvt.s32.f32 %v127
    %v144 = vld [vmem:[#allocation5] sm:$0xff]
    %v145 = vld [vmem:[#allocation5 + $0x8] sm:$0xff]
    %v146 = vld [vmem:[#allocation5 + $0x10] sm:$0xff]
    %v147 = vld [vmem:[#allocation5 + $0x18] sm:$0xff]
    %148 = vmatprep.subr.mxu0 0.0
    %149 = vmatpush1.msra.mxu0 %v143
    %150 = vmatprep.subr.mxu0 0.0
    %151 = vmatpush1.msra.mxu0 %v142
    %152 = vmatprep.subr.mxu0 0.0
    %153 = vmatpush1.msra.mxu0 %v141
    %154 = vmatprep.subr.mxu0 0.0
    %155 = vmatpush1.msra.mxu0 %v140
    %156 = vmatprep.subr.mxu0 0.0
    %157 = vmatpush1.msra.mxu0 %v139
    %158 = vmatprep.subr.mxu0 0.0
    %159 = vmatpush1.msra.mxu0 %v138
    %160 = vmatprep.subr.mxu0 0.0
    %161 = vmatpush1.msra.mxu0 %v137
    %162 = vmatprep.subr.mxu0 0.0
    %163 = vmatpush1.msra.mxu0 %v136
    %164 = vmatprep.subr.mxu0 0.0
    %165 = vmatpush1.msra.mxu0 %v135
    %166 = vmatprep.subr.mxu0 0.0
    %167 = vmatpush1.msra.mxu0 %v134
    %168 = vmatprep.subr.mxu0 0.0
    %169 = vmatpush1.msra.mxu0 %v133
    %170 = vmatprep.subr.mxu0 0.0
    %171 = vmatpush1.msra.mxu0 %v132
    %172 = vmatprep.subr.mxu0 0.0
    %173 = vmatpush1.msra.mxu0 %v131
    %174 = vmatprep.subr.mxu0 0.0
    %175 = vmatpush1.msra.mxu0 %v130
    %176 = vmatprep.subr.mxu0 0.0
    %177 = vmatpush1.msra.mxu0 %v129
    %178 = vmatprep.subr.mxu0 0.0
    %179 = vmatpush1.msra.mxu0 %v128
    %180 = vmatprep.subr.mxu0 0.0
    %181 = vmatpush2.msra.mxu0 0.0
    %182 = vmatprep.subr.mxu0 0.0
    %183 = vmatpush2.msra.mxu0 0.0
    %184 = vmatprep.subr.mxu0 0.0
    %185 = vmatpush2.msra.mxu0 0.0
    %186 = vmatprep.subr.mxu0 0.0
    %187 = vmatpush2.msra.mxu0 0.0
    %188 = vmatprep.subr.mxu0 0.0
    %189 = vmatpush2.msra.mxu0 0.0
    %190 = vmatprep.subr.mxu0 0.0
    %191 = vmatpush2.msra.mxu0 0.0
    %192 = vmatprep.subr.mxu0 0.0
    %193 = vmatpush2.msra.mxu0 0.0
    %194 = vmatprep.subr.mxu0 0.0
    %195 = vmatpush2.msra.mxu0 0.0
    %196 = vmatprep.subr.mxu0 0.0
    %197 = vmatpush2.msra.mxu0 0.0
    %198 = vmatprep.subr.mxu0 0.0
    %199 = vmatpush2.msra.mxu0 0.0
    %200 = vmatprep.subr.mxu0 0.0
    %201 = vmatpush2.msra.mxu0 0.0
    %202 = vmatprep.subr.mxu0 0.0
    %203 = vmatpush2.msra.mxu0 0.0
    %204 = vmatprep.subr.mxu0 0.0
    %205 = vmatpush2.msra.mxu0 0.0
    %206 = vmatprep.subr.mxu0 0.0
    %207 = vmatpush2.msra.mxu0 0.0
    %208 = vmatprep.subr.mxu0 0.0
    %209 = vmatpush2.msra.mxu0 0.0
    %210 = vmatprep.subr.mxu0 0.0
    %211 = vmatpush2.msra.mxu0 0.0
    %212 = vmatprep.mubr.f32.mxu0 0.0
    %213 = vmatmul.mubr.f32.gmra.mxu0 %v144
    %v214 = vpop.f32.mrf.mxu0
    %v215 = vadd.f32 0.0, %v214
    %v216 = vpop.f32.mrf.mxu0
    %217 = vmatprep.mubr.f32.mxu0 0.0
    %218 = vmatmul.mubr.f32.gmra.mxu0 %v145
    %v219 = vpop.f32.mrf.mxu0
    %v220 = vadd.f32 0.0, %v219
    %v221 = vpop.f32.mrf.mxu0
    %222 = vmatprep.mubr.f32.mxu0 0.0
    %223 = vmatmul.mubr.f32.gmra.mxu0 %v146
    %v224 = vpop.f32.mrf.mxu0
    %v225 = vadd.f32 0.0, %v224
    %v226 = vpop.f32.mrf.mxu0
    %227 = vmatprep.mubr.f32.mxu0 0.0
    %228 = vmatmul.mubr.f32.gmra.mxu0 %v147
    %v229 = vpop.f32.mrf.mxu0
    %v230 = vadd.f32 0.0, %v229
    %v231 = vpop.f32.mrf.mxu0
    %232 = vdwg.mxu0
    %233 = vst [vmem:[#allocation7] sm:$0xff] %v215
    %234 = vst [vmem:[#allocation7 + $0x8] sm:$0xff] %v220
    %235 = vst [vmem:[#allocation7 + $0x10] sm:$0xff] %v225
    %236 = vst [vmem:[#allocation7 + $0x18] sm:$0xff] %v230
    // Predicated region
    $region18: #{tpu_custom_call.1} parent=1 // pred_check
      _
    $region19: #{tpu_custom_call.1} parent=1 // pred_check_branch
      %238 = sbr.rel (0) target = $region21
    $region20: #{tpu_custom_call.1} parent=1 // pred_region
      %s240 = ssub.s32 512, 512
      %241 = vsyncadd [#allocation4], %s240
      %s242 = sshll.u32 [#allocation7], 4
      %s243 = int_to_ptr.vmem [resolvable:$true] %s242
      %248 = dma.vmem_to_hbm [thread:$0]  %s243, 512, %s2, [#allocation4], 128, 128, 8
    $region21: #{tpu_custom_call.1} parent=1 // pred_fallthru
      _
    // Predicated region
    $region22: #{tpu_custom_call.1} parent=1 // pred_check
      _
    $region23: #{tpu_custom_call.1} parent=1 // pred_check_branch
      %250 = sbr.rel (0) target = $region25
    $region24: #{tpu_custom_call.1} parent=1 // pred_region
      %251 = dma.done [#allocation4], 512
    $region25: #{tpu_custom_call.1} parent=1 // pred_fallthru
      _
    %252 = vsyncpa [#allocation3], 1
    %253 = vsyncpa [#allocation6], 1
    %254 = vsyncpa [#allocation4], 1

</llo_original>
